<compile_context>
chip_gen: v7x
topology: tpu7x:2x2x1
jax: 0.10.0
libtpu: 0.0.40
codegen_flags: <defaults>
</compile_context>

<pallas_src>
import functools

import numpy as np
import jax
import jax.numpy as jnp
from jax import lax
from jax.experimental import pallas as pl
from jax.experimental.pallas import tpu as pltpu

LANE = 128
DEFAULT_TILE_N = 512                      # bf16 blocks: 512 rows @ S=25, Dp=128 ~ 1.6 MiB (v7x-safe)
VMEM_LIMIT_BYTES = 48 * 1024 * 1024       # explicit scoped-VMEM cap (< v7x 64 MiB physical)


def _round_up(x, m):
    return ((x + m - 1) // m) * m


def _pick_tile(n, tile_n=DEFAULT_TILE_N):
    """Row-tile: multiple of 16 (bf16 sublane pack), capped at tile_n, and split
    into >= 2 grid steps when possible so both v7x TensorCores get work."""
    if n <= 16:
        return _round_up(n, 8)
    half = _round_up((n + 1) // 2, 16)
    return min(_round_up(tile_n, 16), half)


# ----------------------------- Pallas kernels ------------------------------

def _mean_agg_kernel(x_ref, neib_ref, wx_ref, wn_ref, o_ref, *, apply_relu):
    # x_ref:    (T, Dp)      bf16 self features (padded lanes are zero)
    # neib_ref: (S, T, Dp)   bf16 neighbors, sample-major -> VALU adds over axis 0
    # wx_ref:   (Dp, C)      bf16, cols [0:dout] hold fc_x (block-diag packing)
    # wn_ref:   (Dp, C)      bf16, cols [dout:2*dout] hold fc_neib pre-scaled by 1/S
    # o_ref:    (T, C)       bf16 = [fc_x(x) | fc_neib(mean(neibs))] (+ ReLU)
    agg = jnp.sum(neib_ref[...].astype(jnp.float32), axis=0)          # f32 accumulation
    h = (jnp.dot(x_ref[...], wx_ref[...], preferred_element_type=jnp.float32)
         + jnp.dot(agg.astype(jnp.bfloat16), wn_ref[...],
                   preferred_element_type=jnp.float32))               # (T, C) f32
    if apply_relu:
        h = jnp.maximum(h, 0.0)
    o_ref[...] = h.astype(o_ref.dtype)


def _mean_agg_norm_fc_kernel(x_ref, neib_ref, wx_ref, wn_ref, fcw_ref, fcb_ref, o_ref,
                             *, apply_relu):
    # Last layer fused with F.normalize(dim=1) and the final nn.Linear (row-local math).
    agg = jnp.sum(neib_ref[...].astype(jnp.float32), axis=0)
    h = (jnp.dot(x_ref[...], wx_ref[...], preferred_element_type=jnp.float32)
         + jnp.dot(agg.astype(jnp.bfloat16), wn_ref[...],
                   preferred_element_type=jnp.float32))               # (T, C) f32
    if apply_relu:
        h = jnp.maximum(h, 0.0)
    # Padded lanes of h are exactly zero -> norm is uncontaminated.
    sumsq = jnp.sum(h * h, axis=1, keepdims=True)
    inv = lax.rsqrt(jnp.maximum(sumsq, 1e-24))     # == 1/max(||h||, 1e-12) (F.normalize eps)
    hn = (h * inv).astype(jnp.bfloat16)
    o_ref[...] = (jnp.dot(hn, fcw_ref[...], preferred_element_type=jnp.float32)
                  + fcb_ref[...]).astype(o_ref.dtype)


def mean_aggregator(x, neibs, wx, wn, *, apply_relu, tile_n=DEFAULT_TILE_N):
    """MeanAggregator on padded bf16 layouts.

    x:     (N, Dp)    bf16 self features
    neibs: (S, N, Dp) bf16 neighbor features (sample-major)
    wx:    (Dp, C)    bf16 packed fc_x weight
    wn:    (Dp, C)    bf16 packed fc_neib weight, pre-scaled by 1/S
    returns (N, C) bf16
    """
    n, dp = x.shape
    s = neibs.shape[0]
    c = wx.shape[1]
    tile = _pick_tile(n, tile_n)

    # TODO(synk): weight specs could use pipeline_mode=pl.Buffered(1) (or a VMEM scratch
    # load) to avoid double-buffering the invariant weights; negligible at these sizes.
    kernel = functools.partial(_mean_agg_kernel, apply_relu=apply_relu)
    return pl.pallas_call(
        kernel,
        out_shape=jax.ShapeDtypeStruct((n, c), jnp.bfloat16),
        grid=(pl.cdiv(n, tile),),
        in_specs=[
            pl.BlockSpec((tile, dp), lambda i: (i, 0)),
            pl.BlockSpec((s, tile, dp), lambda i: (0, i, 0)),
            pl.BlockSpec((dp, c), lambda i: (0, 0)),
            pl.BlockSpec((dp, c), lambda i: (0, 0)),
        ],
        out_specs=pl.BlockSpec((tile, c), lambda i: (i, 0)),
        compiler_params=pltpu.CompilerParams(
            dimension_semantics=("parallel",),
            vmem_limit_bytes=VMEM_LIMIT_BYTES),
    )(x, neibs, wx, wn)


def mean_agg_norm_fc(x, neibs, wx, wn, fc_w, fc_b, *, apply_relu, tile_n=DEFAULT_TILE_N):
    """Last-layer MeanAggregator fused with F.normalize + final Linear. Returns (N, Cout) f32."""
    n, dp = x.shape
    s = neibs.shape[0]
    c = wx.shape[1]
    c_out = fc_w.shape[1]
    tile = _pick_tile(n, tile_n)

    kernel = functools.partial(_mean_agg_norm_fc_kernel, apply_relu=apply_relu)
    return pl.pallas_call(
        kernel,
        out_shape=jax.ShapeDtypeStruct((n, c_out), jnp.float32),
        grid=(pl.cdiv(n, tile),),
        in_specs=[
            pl.BlockSpec((tile, dp), lambda i: (i, 0)),
            pl.BlockSpec((s, tile, dp), lambda i: (0, i, 0)),
            pl.BlockSpec((dp, c), lambda i: (0, 0)),
            pl.BlockSpec((dp, c), lambda i: (0, 0)),
            pl.BlockSpec((c, c_out), lambda i: (0, 0)),
            pl.BlockSpec((1, c_out), lambda i: (0, 0)),
        ],
        out_specs=pl.BlockSpec((tile, c_out), lambda i: (i, 0)),
        compiler_params=pltpu.CompilerParams(
            dimension_semantics=("parallel",),
            vmem_limit_bytes=VMEM_LIMIT_BYTES),
    )(x, neibs, wx, wn, fc_w, fc_b)


# ------------------------- parameter init & padding -------------------------

def init_params(key, input_dim, n_classes, layer_specs):
    """Deterministic parameter init (PyTorch-Linear-like uniform fan-in bounds), logical shapes."""
    params = {"agg": []}
    dim = input_dim
    for spec in layer_specs:
        dout = spec["output_dim"]
        key, k1, k2 = jax.random.split(key, 3)
        bound = 1.0 / np.sqrt(dim)
        w_x = jax.random.uniform(k1, (dim, dout), jnp.float32, -bound, bound)
        w_n = jax.random.uniform(k2, (dim, dout), jnp.float32, -bound, bound)
        params["agg"].append((w_x, w_n))
        dim = 2 * dout  # MeanAggregator concatenates -> output_dim doubles
    key, k1, k2 = jax.random.split(key, 3)
    bound = 1.0 / np.sqrt(dim)
    params["fc_w"] = jax.random.uniform(k1, (dim, n_classes), jnp.float32, -bound, bound)
    params["fc_b"] = jax.random.uniform(k2, (n_classes,), jnp.float32, -bound, bound)
    return params


def _pad_weight(w, in_lane_index, in_pad, out_pad, col_offset=0):
    """Scatter logical weight rows/cols into their padded-lane positions; zero elsewhere."""
    din_l, dout_l = w.shape
    rows = jnp.asarray(np.asarray(in_lane_index))
    cols = col_offset + jnp.arange(dout_l)
    wp = jnp.zeros((in_pad, out_pad), jnp.float32)
    return wp.at[rows[:, None], cols[None, :]].set(w.astype(jnp.float32))


def prepare_kernel_params(params, input_dim, layer_specs, n_classes):
    """Build packed/padded bf16 kernel weights (block-diag concat packing, 1/S folded in)."""
    num_layers = len(layer_specs)
    sample_counts = [spec["n_train_samples"] for spec in layer_specs]

    kp = {"layers": []}
    lane_index = np.arange(input_dim)          # logical feature index -> padded lane position
    in_pad = _round_up(input_dim, LANE)

    for j, ((w_x, w_n), spec) in enumerate(zip(params["agg"], layer_specs)):
        dout = spec["output_dim"]
        c = _round_up(2 * dout, LANE)          # both concat halves share ONE 128-aligned slab
        wx_p = _pad_weight(w_x, lane_index, in_pad, c, col_offset=0).astype(jnp.bfloat16)
        # In layer j, hop k aggregates with S = sample_counts[k]; fold 1/S into fc_neib per hop.
        wn_by_hop = []
        for k in range(num_layers - j):
            s = float(sample_counts[k])
            wn_by_hop.append(
                _pad_weight(w_n / s, lane_index, in_pad, c, col_offset=dout).astype(jnp.bfloat16))
        kp["layers"].append({
            "wx": wx_p,
            "wn_by_hop": wn_by_hop,
            "apply_relu": spec["activation_relu"],
        })
        # Next layer's input layout: logical features 0..2*dout-1 occupy lanes 0..2*dout-1 of C.
        lane_index = np.arange(2 * dout)
        in_pad = c

    c_pad = _round_up(n_classes, LANE)
    kp["fc_w"] = _pad_weight(params["fc_w"], lane_index, in_pad, c_pad).astype(jnp.bfloat16)
    kp["fc_b"] = jnp.zeros((1, c_pad), jnp.float32).at[0, :n_classes].set(params["fc_b"])
    kp["n_classes"] = n_classes
    kp["feat_pad"] = _round_up(input_dim, LANE)
    return kp


# ------------------------------ JAX glue ------------------------------------

def uniform_neighbor_sampler(key, adj, ids, n_samples):
    # TODO(synk): random neighbor sampling stays host-side JAX glue (no Pallas equivalent needed).
    # Emits SAMPLE-MAJOR flat ids: out[s * len(ids) + r] = s-th sampled neighbor of ids[r],
    # so gathered features reshape directly to the kernel's (S, N, Dp) layout.
    neighbors = adj[ids]                                               # (n, degree)
    col = jax.random.randint(key, (n_samples, ids.shape[0]), 0, adj.shape[1])
    picked = neighbors[jnp.arange(ids.shape[0])[None, :], col]         # (S, n)
    return picked.reshape(-1)


def sample_hops(adj, ids, layer_specs, key):
    hop_ids = [ids]
    cur = ids
    for spec in layer_specs:
        key, sk = jax.random.split(key)
        cur = uniform_neighbor_sampler(sk, adj, cur, spec["n_train_samples"])
        hop_ids.append(cur)
    return hop_ids


def gs_supervised_forward(kernel_params, hop_ids, feats, layer_specs):
    """Mirror of GSSupervised.forward (train=True path), IdentityPrep."""
    input_dim = feats.shape[1]
    # Pad features to a lane-dense width once and store in bf16 (halves HBM traffic of the
    # dominant gathered tensors); padded lanes are exactly zero everywhere downstream.
    feats_p = jnp.pad(feats, ((0, 0), (0, kernel_params["feat_pad"] - input_dim))
                      ).astype(jnp.bfloat16)

    # TODO(synk): the feats_p[ids] gathers could be fused into the aggregator launch
    # (PrefetchScalarGridSpec + manual DMA gather into VMEM scratch) to avoid materializing
    # the gathered (S*N, Dp) tensor in HBM; kept as JAX glue here.
    all_feats = [feats_p[h] for h in hop_ids]          # prep(ids, feats[ids], layer_idx) == identity

    sample_counts = [spec["n_train_samples"] for spec in layer_specs]
    layers = kernel_params["layers"]
    for j, layer in enumerate(layers):
        is_last = (j == len(layers) - 1)
        new_feats = []
        # TODO(synk): hops of one layer could be fused into a single pallas_call (hop grid axis,
        # S padded to max(S_k), stacked pre-scaled wn weights) to cut launch overhead.
        for k in range(len(all_feats) - 1):
            x = all_feats[k]
            n_k, dp = x.shape
            neibs = all_feats[k + 1].reshape(sample_counts[k], n_k, dp)   # (S, N, Dp) sample-major
            if is_last:
                out = mean_agg_norm_fc(x, neibs, layer["wx"], layer["wn_by_hop"][k],
                                       kernel_params["fc_w"], kernel_params["fc_b"],
                                       apply_relu=layer["apply_relu"])
            else:
                out = mean_aggregator(x, neibs, layer["wx"], layer["wn_by_hop"][k],
                                      apply_relu=layer["apply_relu"])
            new_feats.append(out)
        all_feats = new_feats
    assert len(all_feats) == 1, "len(all_feats) != 1"

    return all_feats[0][:, :kernel_params["n_classes"]]


def reference_forward(params, hop_ids, feats, layer_specs):
    """Pure-JAX f32 reference of the same forward (matches the PyTorch module's math)."""
    sample_counts = [spec["n_train_samples"] for spec in layer_specs]
    all_feats = [feats[h] for h in hop_ids]
    for (w_x, w_n), spec in zip(params["agg"], layer_specs):
        new_feats = []
        for k in range(len(all_feats) - 1):
            x = all_feats[k]
            neibs = all_feats[k + 1].reshape(sample_counts[k], x.shape[0], -1)
            agg = jnp.mean(neibs, axis=0)
            h = jnp.concatenate([x @ w_x, agg @ w_n], axis=1)
            if spec["activation_relu"]:
                h = jnp.maximum(h, 0.0)
            new_feats.append(h)
        all_feats = new_feats
    out = all_feats[0]
    norm = jnp.sqrt(jnp.sum(out * out, axis=1, keepdims=True))
    out = out / jnp.maximum(norm, 1e-12)
    return out @ params["fc_w"] + params["fc_b"]


# --------------------------------- main --------------------------------------

if __name__ == "__main__":
    key = jax.random.PRNGKey(0)

    # Small deterministic problem setup.
    n_nodes = 32
    input_dim = 16
    n_classes = 4
    degree = 6
    batch = 8

    layer_specs = [
        {"n_train_samples": 4, "output_dim": 8, "activation_relu": True},
        {"n_train_samples": 3, "output_dim": 8, "activation_relu": False},
    ]

    key, k_feat, k_adj, k_ids, k_param, k_samp = jax.random.split(key, 6)
    feats = jax.random.normal(k_feat, (n_nodes, input_dim), jnp.float32)
    adj = jax.random.randint(k_adj, (n_nodes, degree), 0, n_nodes, dtype=jnp.int32)
    ids = jax.random.randint(k_ids, (batch,), 0, n_nodes, dtype=jnp.int32)

    params = init_params(k_param, input_dim, n_classes, layer_specs)
    kernel_params = prepare_kernel_params(params, input_dim, layer_specs, n_classes)

    hop_ids = sample_hops(adj, ids, layer_specs, k_samp)
    preds = gs_supervised_forward(kernel_params, hop_ids, feats, layer_specs)
    preds = jax.block_until_ready(preds)

    assert preds.shape == (batch, n_classes), preds.shape
    assert preds.dtype == jnp.float32
    assert bool(jnp.all(jnp.isfinite(preds)))

    # Tolerance-check against a pure-JAX f32 reference (bf16 storage/MXU => not bit-exact).
    ref = reference_forward(params, hop_ids, feats, layer_specs)
    max_err = float(jnp.max(jnp.abs(preds - ref)))
    assert max_err < 0.1, max_err

    print("KERNEL_OK")
</pallas_src>

<mosaic_0001>
module attributes {stable_mosaic.version = 11 : i64} {
  func.func @_mean_agg_kernel(%arg0: i32, %arg1: memref<8x128xbf16, #tpu.memory_space<vmem>>, %arg2: memref<4x8x128xbf16, #tpu.memory_space<vmem>>, %arg3: memref<128x128xbf16, #tpu.memory_space<vmem>>, %arg4: memref<128x128xbf16, #tpu.memory_space<vmem>>, %arg5: memref<8x128xbf16, #tpu.memory_space<vmem>>) attributes {dimension_semantics = [#tpu.dimension_semantics<parallel>], iteration_bounds = array<i64: 1>, scalar_prefetch = 0 : i64, scratch_operands = 0 : i64, tpu.core_type = #tpu.core_type<tc>, window_params = [{transform_indices = @transform_0, window_bounds = array<i64: 8, 128>}, {transform_indices = @transform_1, window_bounds = array<i64: 4, 8, 128>}, {pipeline_mode = #tpu.pipeline_mode<synchronous>, transform_indices = @transform_2, window_bounds = array<i64: 128, 128>}, {pipeline_mode = #tpu.pipeline_mode<synchronous>, transform_indices = @transform_3, window_bounds = array<i64: 128, 128>}, {transform_indices = @transform_4, window_bounds = array<i64: 8, 128>}]} {
    %c0 = arith.constant 0 : index
    %c0_0 = arith.constant 0 : index
    %c0_1 = arith.constant 0 : index
    %0 = vector.load %arg2[%c0, %c0_0, %c0_1] : memref<4x8x128xbf16, #tpu.memory_space<vmem>>, vector<4x8x128xbf16>
    %1 = arith.extf %0 : vector<4x8x128xbf16> to vector<4x8x128xf32>
    %cst = arith.constant dense<0.000000e+00> : vector<8x128xf32>
    %2 = vector.multi_reduction <add>, %1, %cst [0] : vector<4x8x128xf32> to vector<8x128xf32>
    %c0_2 = arith.constant 0 : index
    %c0_3 = arith.constant 0 : index
    %3 = vector.load %arg1[%c0_2, %c0_3] : memref<8x128xbf16, #tpu.memory_space<vmem>>, vector<8x128xbf16>
    %c0_4 = arith.constant 0 : index
    %c0_5 = arith.constant 0 : index
    %4 = vector.load %arg3[%c0_4, %c0_5] : memref<128x128xbf16, #tpu.memory_space<vmem>>, vector<128x128xbf16>
    %cst_6 = arith.constant dense<0.000000e+00> : vector<8x128xf32>
    %5 = tpu.matmul %3, %4, %cst_6 {dimension_numbers = #tpu.dot_dimension_numbers<[1], [0], [0], [1], [0, 0, 1, 1], [], []>} : vector<8x128xbf16>, vector<128x128xbf16>, vector<8x128xf32> -> vector<8x128xf32>
    %6 = arith.truncf %2 : vector<8x128xf32> to vector<8x128xbf16>
    %c0_7 = arith.constant 0 : index
    %c0_8 = arith.constant 0 : index
    %7 = vector.load %arg4[%c0_7, %c0_8] : memref<128x128xbf16, #tpu.memory_space<vmem>>, vector<128x128xbf16>
    %cst_9 = arith.constant dense<0.000000e+00> : vector<8x128xf32>
    %8 = tpu.matmul %6, %7, %cst_9 {dimension_numbers = #tpu.dot_dimension_numbers<[1], [0], [0], [1], [0, 0, 1, 1], [], []>} : vector<8x128xbf16>, vector<128x128xbf16>, vector<8x128xf32> -> vector<8x128xf32>
    %9 = arith.addf %5, %8 : vector<8x128xf32>
    %cst_10 = arith.constant 0.000000e+00 : f32
    %10 = vector.broadcast %cst_10 : f32 to vector<8x128xf32>
    %11 = arith.maximumf %9, %10 : vector<8x128xf32>
    %12 = arith.truncf %11 : vector<8x128xf32> to vector<8x128xbf16>
    %c0_11 = arith.constant 0 : index
    %c0_12 = arith.constant 0 : index
    %13 = vector.load %arg5[%c0_11, %c0_12] : memref<8x128xbf16, #tpu.memory_space<vmem>>, vector<8x128xbf16>
    tpu.vector_store %arg5[%c0_11, %c0_12], %12 {strides = array<i32>} : memref<8x128xbf16, #tpu.memory_space<vmem>>, vector<8x128xbf16>,
    return
  }
  func.func @transform_0(%arg0: i32) -> (i32, i32) {
    %c0_i32 = arith.constant 0 : i32
    %c0_i32_0 = arith.constant 0 : i32
    return %arg0, %c0_i32 : i32, i32
  }
  func.func @transform_1(%arg0: i32) -> (i32, i32, i32) {
    %c0_i32 = arith.constant 0 : i32
    %c0_i32_0 = arith.constant 0 : i32
    %c0_i32_1 = arith.constant 0 : i32
    return %c0_i32, %arg0, %c0_i32_0 : i32, i32, i32
  }
  func.func @transform_2(%arg0: i32) -> (i32, i32) {
    %c0_i32 = arith.constant 0 : i32
    %c0_i32_0 = arith.constant 0 : i32
    %c0_i32_1 = arith.constant 0 : i32
    return %c0_i32, %c0_i32_0 : i32, i32
  }
  func.func @transform_3(%arg0: i32) -> (i32, i32) {
    %c0_i32 = arith.constant 0 : i32
    %c0_i32_0 = arith.constant 0 : i32
    %c0_i32_1 = arith.constant 0 : i32
    return %c0_i32, %c0_i32_0 : i32, i32
  }
  func.func @transform_4(%arg0: i32) -> (i32, i32) {
    %c0_i32 = arith.constant 0 : i32
    %c0_i32_0 = arith.constant 0 : i32
    return %arg0, %c0_i32 : i32, i32
  }
}

</mosaic_0001>

<llo_original>
// kernel: tpu_custom_call.1
$region0: #{tpu_custom_call.1}
  #allocation0 [shape = 'u32[]', space=smem, size = 0x4, offset = 0x4, fixed_abs, tag = 'smem constant byte address 0x4 - core index']
  #allocation1 [shape = 'u32[144,128]{1,0:T(1,128)}', space=vmem, size = 0x12000, scoped, tag = 'internal scratch']
  %s0 = inlined_call_operand.hbm [shape: bf16[8,128], index: 0, kind: input, shape index: {}]
  %s1 = inlined_call_operand.hbm [shape: bf16[4,8,128], index: 1, kind: input, shape index: {}]
  %s2 = inlined_call_operand.hbm [shape: bf16[128,128], index: 2, kind: input, shape index: {}]
  %s3 = inlined_call_operand.hbm [shape: bf16[128,128], index: 3, kind: input, shape index: {}]
  %s4 = inlined_call_operand.hbm [shape: bf16[8,128], index: 4, kind: output, shape index: {}]
  %s5 = sld [smem:[#allocation0]]
  $region42: #{tpu_custom_call.1} parent=0
    _
  %s7 = ssub.s32 1, %s5
  %s8 = scalar_select 0, %s7, %s5
  $region1: #{tpu_custom_call.1} parent=0
    #allocation2 [shape = 'u8[2048]{0}', space=vmem, size = 0x800, scoped, tag = 'input window, operand 0, single buffered']
    #allocation3 [shape = 's32[1]{0}', space=sflag, size = 0x4, scoped, tag = 'scoped memory for tpu_custom_call.1']
    #allocation4 [shape = 's32[1]{0}', space=sflag, size = 0x4, scoped, tag = 'scoped memory for tpu_custom_call.1']
    #allocation5 [shape = 'u8[8192]{0}', space=vmem, size = 0x2000, scoped, tag = 'input window, operand 1, single buffered']
    #allocation6 [shape = 's32[1]{0}', space=sflag, size = 0x4, scoped, tag = 'scoped memory for tpu_custom_call.1']
    #allocation7 [shape = 'u8[32768]{0}', space=vmem, size = 0x8000, scoped, tag = 'input window, operand 2, single buffered']
    #allocation8 [shape = 'u8[32768]{0}', space=vmem, size = 0x8000, scoped, tag = 'input window, operand 3, single buffered']
    #allocation9 [shape = 's32[1]{0}', space=sflag, size = 0x4, scoped, tag = 'scoped memory for tpu_custom_call.1']
    #allocation10 [shape = 'u8[2048]{0}', space=vmem, size = 0x800, scoped, tag = 'output window, operand 0, single buffered']
    %9 = vsyncpa [#allocation3], 0
    %10 = vsyncpa [#allocation6], 0
    %11 = vsyncpa [#allocation9], 0
    %12 = vsyncpa [#allocation4], 0
    // Predicated region
    $region2: #{tpu_custom_call.1} parent=1 // pred_check
      _
    $region3: #{tpu_custom_call.1} parent=1 // pred_check_branch
      %14 = sbr.rel (0) target = $region5
    $region4: #{tpu_custom_call.1} parent=1 // pred_region
      %s16 = ssub.s32 64, 64
      %17 = vsyncadd [#allocation3], %s16
      %s19 = sshll.u32 [#allocation2], 4
      %s20 = int_to_ptr.vmem [resolvable:$true] %s19
      %22 = dma.hbm_to_vmem [thread:$0]  %s0, 64, %s20, [#allocation3]
    $region5: #{tpu_custom_call.1} parent=1 // pred_fallthru
      _
    // Predicated region
    $region6: #{tpu_custom_call.1} parent=1 // pred_check
      _
    $region7: #{tpu_custom_call.1} parent=1 // pred_check_branch
      %24 = sbr.rel (0) target = $region9
    $region8: #{tpu_custom_call.1} parent=1 // pred_region
      %s26 = ssub.s32 256, 256
      %27 = vsyncadd [#allocation6], %s26
      %s28 = sshll.u32 [#allocation5], 4
      %s29 = int_to_ptr.vmem [resolvable:$true] %s28
      %34 = dma.hbm_to_vmem [thread:$0]  %s1, 256, %s29, [#allocation6], 64, 64, 4
    $region9: #{tpu_custom_call.1} parent=1 // pred_fallthru
      _
    // Predicated region
    $region10: #{tpu_custom_call.1} parent=1 // pred_check
      _
    $region11: #{tpu_custom_call.1} parent=1 // pred_check_branch
      %36 = sbr.rel (0) target = $region13
    $region12: #{tpu_custom_call.1} parent=1 // pred_region
      %s38 = ssub.s32 1024, 1024
      %39 = vsyncadd [#allocation6], %s38
      %s40 = sshll.u32 [#allocation7], 4
      %s41 = int_to_ptr.vmem [resolvable:$true] %s40
      %46 = dma.hbm_to_vmem [thread:$0]  %s2, 1024, %s41, [#allocation6], 64, 64, 4
    $region13: #{tpu_custom_call.1} parent=1 // pred_fallthru
      _
    // Predicated region
    $region14: #{tpu_custom_call.1} parent=1 // pred_check
      _
    $region15: #{tpu_custom_call.1} parent=1 // pred_check_branch
      %48 = sbr.rel (0) target = $region17
    $region16: #{tpu_custom_call.1} parent=1 // pred_region
      %s50 = ssub.s32 1024, 1024
      %51 = vsyncadd [#allocation9], %s50
      %s52 = sshll.u32 [#allocation8], 4
      %s53 = int_to_ptr.vmem [resolvable:$true] %s52
      %58 = dma.hbm_to_vmem [thread:$0]  %s3, 1024, %s53, [#allocation9], 64, 64, 4
    $region17: #{tpu_custom_call.1} parent=1 // pred_fallthru
      _
    // Predicated region
    $region18: #{tpu_custom_call.1} parent=1 // pred_check
      _
    $region19: #{tpu_custom_call.1} parent=1 // pred_check_branch
      %60 = sbr.rel (0) target = $region21
    $region20: #{tpu_custom_call.1} parent=1 // pred_region
      %61 = dma.done [#allocation3], 64
    $region21: #{tpu_custom_call.1} parent=1 // pred_fallthru
      _
    // Predicated region
    $region22: #{tpu_custom_call.1} parent=1 // pred_check
      _
    $region23: #{tpu_custom_call.1} parent=1 // pred_check_branch
      %63 = sbr.rel (0) target = $region25
    $region24: #{tpu_custom_call.1} parent=1 // pred_region
      %64 = dma.done [#allocation6], 256
    $region25: #{tpu_custom_call.1} parent=1 // pred_fallthru
      _
    // Predicated region
    $region26: #{tpu_custom_call.1} parent=1 // pred_check
      _
    $region27: #{tpu_custom_call.1} parent=1 // pred_check_branch
      %66 = sbr.rel (0) target = $region29
    $region28: #{tpu_custom_call.1} parent=1 // pred_region
      %67 = dma.done [#allocation6], 1024
    $region29: #{tpu_custom_call.1} parent=1 // pred_fallthru
      _
    // Predicated region
    $region30: #{tpu_custom_call.1} parent=1 // pred_check
      _
    $region31: #{tpu_custom_call.1} parent=1 // pred_check_branch
      %69 = sbr.rel (0) target = $region33
    $region32: #{tpu_custom_call.1} parent=1 // pred_region
      %70 = dma.done [#allocation9], 1024
    $region33: #{tpu_custom_call.1} parent=1 // pred_fallthru
      _
    %v72 = vld [vmem:[#allocation5] sm:$0xf]
    %v73 = vld [vmem:[#allocation5 + $0x4] sm:$0xf]
    %v74 = vld [vmem:[#allocation5 + $0x8] sm:$0xf]
    %v75 = vld [vmem:[#allocation5 + $0xc] sm:$0xf]
    %v76 = vunpack.c.l.bf16 %v72
    %v77 = vunpack.c.l.bf16 %v73
    %v78 = vunpack.c.l.bf16 %v74
    %v79 = vunpack.c.l.bf16 %v75
    %v80 = vadd.f32 %v76, %v77
    %v81 = vadd.f32 %v80, %v78
    %v82 = vadd.f32 %v81, %v79
    %v83 = vld [vmem:[#allocation2] sm:$0xf]
    %v84 = vld [vmem:[#allocation7] sm:$0xf]
    %v85 = vld [vmem:[#allocation7 + $0x4] sm:$0xf]
    %v86 = vld [vmem:[#allocation7 + $0x8] sm:$0xf]
    %v87 = vld [vmem:[#allocation7 + $0xc] sm:$0xf]
    %v88 = vld [vmem:[#allocation7 + $0x10] sm:$0xf]
    %v89 = vld [vmem:[#allocation7 + $0x14] sm:$0xf]
    %v90 = vld [vmem:[#allocation7 + $0x18] sm:$0xf]
    %v91 = vld [vmem:[#allocation7 + $0x1c] sm:$0xf]
    %v92 = vld [vmem:[#allocation7 + $0x20] sm:$0xf]
    %v93 = vld [vmem:[#allocation7 + $0x24] sm:$0xf]
    %v94 = vld [vmem:[#allocation7 + $0x28] sm:$0xf]
    %v95 = vld [vmem:[#allocation7 + $0x2c] sm:$0xf]
    %v96 = vld [vmem:[#allocation7 + $0x30] sm:$0xf]
    %v97 = vld [vmem:[#allocation7 + $0x34] sm:$0xf]
    %v98 = vld [vmem:[#allocation7 + $0x38] sm:$0xf]
    %v99 = vld [vmem:[#allocation7 + $0x3c] sm:$0xf]
    %v100 = vpack.c.bf16 %v82, %v82
    %v101 = vld [vmem:[#allocation8] sm:$0xf]
    %v102 = vld [vmem:[#allocation8 + $0x4] sm:$0xf]
    %v103 = vld [vmem:[#allocation8 + $0x8] sm:$0xf]
    %v104 = vld [vmem:[#allocation8 + $0xc] sm:$0xf]
    %v105 = vld [vmem:[#allocation8 + $0x10] sm:$0xf]
    %v106 = vld [vmem:[#allocation8 + $0x14] sm:$0xf]
    %v107 = vld [vmem:[#allocation8 + $0x18] sm:$0xf]
    %v108 = vld [vmem:[#allocation8 + $0x1c] sm:$0xf]
    %v109 = vld [vmem:[#allocation8 + $0x20] sm:$0xf]
    %v110 = vld [vmem:[#allocation8 + $0x24] sm:$0xf]
    %v111 = vld [vmem:[#allocation8 + $0x28] sm:$0xf]
    %v112 = vld [vmem:[#allocation8 + $0x2c] sm:$0xf]
    %v113 = vld [vmem:[#allocation8 + $0x30] sm:$0xf]
    %v114 = vld [vmem:[#allocation8 + $0x34] sm:$0xf]
    %v115 = vld [vmem:[#allocation8 + $0x38] sm:$0xf]
    %v116 = vld [vmem:[#allocation8 + $0x3c] sm:$0xf]
    %v133 = vunpack.c.l.b16 %v101
    %v134 = vunpack.c.l.b16 %v102
    %v135 = vunpack.c.l.b16 %v103
    %v136 = vunpack.c.l.b16 %v104
    %v137 = vunpack.c.l.b16 %v105
    %v138 = vunpack.c.l.b16 %v106
    %v139 = vunpack.c.l.b16 %v107
    %v140 = vunpack.c.l.b16 %v108
    %v141 = vunpack.c.l.b16 %v109
    %v142 = vunpack.c.l.b16 %v110
    %v143 = vunpack.c.l.b16 %v111
    %v144 = vunpack.c.l.b16 %v112
    %v145 = vunpack.c.l.b16 %v113
    %v146 = vunpack.c.l.b16 %v114
    %v147 = vunpack.c.l.b16 %v115
    %v148 = vunpack.c.l.b16 %v116
    %v149 = vpack.c.b16 %v134, %v133
    %v150 = vpack.c.b16 %v136, %v135
    %v151 = vpack.c.b16 %v138, %v137
    %v152 = vpack.c.b16 %v140, %v139
    %v153 = vpack.c.b16 %v142, %v141
    %v154 = vpack.c.b16 %v144, %v143
    %v155 = vpack.c.b16 %v146, %v145
    %v156 = vpack.c.b16 %v148, %v147
    %165 = vmatprep.subr.bf16.mxu0 0
    %166 = vmatpush1.bf16.msra.mxu0 %v149
    %167 = vmatprep.subr.bf16.mxu0 0
    %168 = vmatpush1.bf16.msra.mxu0 %v150
    %169 = vmatprep.subr.bf16.mxu0 0
    %170 = vmatpush1.bf16.msra.mxu0 %v151
    %171 = vmatprep.subr.bf16.mxu0 0
    %172 = vmatpush1.bf16.msra.mxu0 %v152
    %173 = vmatprep.subr.bf16.mxu0 0
    %174 = vmatpush1.bf16.msra.mxu0 %v153
    %175 = vmatprep.subr.bf16.mxu0 0
    %176 = vmatpush1.bf16.msra.mxu0 %v154
    %177 = vmatprep.subr.bf16.mxu0 0
    %178 = vmatpush1.bf16.msra.mxu0 %v155
    %179 = vmatprep.subr.bf16.mxu0 0
    %180 = vmatpush1.bf16.msra.mxu0 %v156
    %181 = vmatprep.subr.bf16.mxu0 0
    %182 = vmatpush1.bf16.msra.mxu0 0
    %183 = vmatprep.subr.bf16.mxu0 0
    %184 = vmatpush1.bf16.msra.mxu0 0
    %185 = vmatprep.subr.bf16.mxu0 0
    %186 = vmatpush1.bf16.msra.mxu0 0
    %187 = vmatprep.subr.bf16.mxu0 0
    %188 = vmatpush1.bf16.msra.mxu0 0
    %189 = vmatprep.subr.bf16.mxu0 0
    %190 = vmatpush1.bf16.msra.mxu0 0
    %191 = vmatprep.subr.bf16.mxu0 0
    %192 = vmatpush1.bf16.msra.mxu0 0
    %193 = vmatprep.subr.bf16.mxu0 0
    %194 = vmatpush1.bf16.msra.mxu0 0
    %195 = vmatprep.subr.bf16.mxu0 0
    %196 = vmatpush1.bf16.msra.mxu0 0
    %197 = vmatprep.mubr.bf16.mxu0 0
    %198 = vmatmul.mubr.bf16.gmra.mrb[0].mxu0 %v100
    %v199 = vpop.f32.mrb[0].mxu0
    %v200 = vadd.f32 0.0, %v199
    %v201 = vpop.f32.mrb[0].mxu0
    %v202 = vpop.f32.mrb[0].mxu0
    %v203 = vpop.f32.mrb[0].mxu0
    %204 = vdwg.mxu0
    %v221 = vunpack.c.l.b16 %v84
    %v222 = vunpack.c.l.b16 %v85
    %v223 = vunpack.c.l.b16 %v86
    %v224 = vunpack.c.l.b16 %v87
    %v225 = vunpack.c.l.b16 %v88
    %v226 = vunpack.c.l.b16 %v89
    %v227 = vunpack.c.l.b16 %v90
    %v228 = vunpack.c.l.b16 %v91
    %v229 = vunpack.c.l.b16 %v92
    %v230 = vunpack.c.l.b16 %v93
    %v231 = vunpack.c.l.b16 %v94
    %v232 = vunpack.c.l.b16 %v95
    %v233 = vunpack.c.l.b16 %v96
    %v234 = vunpack.c.l.b16 %v97
    %v235 = vunpack.c.l.b16 %v98
    %v236 = vunpack.c.l.b16 %v99
    %v237 = vpack.c.b16 %v222, %v221
    %v238 = vpack.c.b16 %v224, %v223
    %v239 = vpack.c.b16 %v226, %v225
    %v240 = vpack.c.b16 %v228, %v227
    %v241 = vpack.c.b16 %v230, %v229
    %v242 = vpack.c.b16 %v232, %v231
    %v243 = vpack.c.b16 %v234, %v233
    %v244 = vpack.c.b16 %v236, %v235
    %253 = vmatprep.subr.bf16.mxu0 0
    %254 = vmatpush1.bf16.msra.mxu0 %v237
    %255 = vmatprep.subr.bf16.mxu0 0
    %256 = vmatpush1.bf16.msra.mxu0 %v238
    %257 = vmatprep.subr.bf16.mxu0 0
    %258 = vmatpush1.bf16.msra.mxu0 %v239
    %259 = vmatprep.subr.bf16.mxu0 0
    %260 = vmatpush1.bf16.msra.mxu0 %v240
    %261 = vmatprep.subr.bf16.mxu0 0
    %262 = vmatpush1.bf16.msra.mxu0 %v241
    %263 = vmatprep.subr.bf16.mxu0 0
    %264 = vmatpush1.bf16.msra.mxu0 %v242
    %265 = vmatprep.subr.bf16.mxu0 0
    %266 = vmatpush1.bf16.msra.mxu0 %v243
    %267 = vmatprep.subr.bf16.mxu0 0
    %268 = vmatpush1.bf16.msra.mxu0 %v244
    %269 = vmatprep.subr.bf16.mxu0 0
    %270 = vmatpush1.bf16.msra.mxu0 0
    %271 = vmatprep.subr.bf16.mxu0 0
    %272 = vmatpush1.bf16.msra.mxu0 0
    %273 = vmatprep.subr.bf16.mxu0 0
    %274 = vmatpush1.bf16.msra.mxu0 0
    %275 = vmatprep.subr.bf16.mxu0 0
    %276 = vmatpush1.bf16.msra.mxu0 0
    %277 = vmatprep.subr.bf16.mxu0 0
    %278 = vmatpush1.bf16.msra.mxu0 0
    %279 = vmatprep.subr.bf16.mxu0 0
    %280 = vmatpush1.bf16.msra.mxu0 0
    %281 = vmatprep.subr.bf16.mxu0 0
    %282 = vmatpush1.bf16.msra.mxu0 0
    %283 = vmatprep.subr.bf16.mxu0 0
    %284 = vmatpush1.bf16.msra.mxu0 0
    %285 = vmatprep.mubr.bf16.mxu0 0
    %286 = vmatmul.mubr.bf16.gmra.mrb[0].mxu0 %v83
    %v287 = vpop.f32.mrb[0].mxu0
    %v288 = vadd.f32 %v200, %v287
    %v289 = vpop.f32.mrb[0].mxu0
    %v290 = vpop.f32.mrb[0].mxu0
    %v291 = vpop.f32.mrb[0].mxu0
    %292 = vdwg.mxu0
    %v293 = vmax.f32 %v288, 0.0
    %v294 = vpack.c.bf16 %v293, %v293
    %295 = vst [vmem:[#allocation10] sm:$0xf] %v294
    // Predicated region
    $region34: #{tpu_custom_call.1} parent=1 // pred_check
      _
    $region35: #{tpu_custom_call.1} parent=1 // pred_check_branch
      %297 = sbr.rel (0) target = $region37
    $region36: #{tpu_custom_call.1} parent=1 // pred_region
      %s299 = ssub.s32 64, 64
      %300 = vsyncadd [#allocation4], %s299
      %s302 = sshll.u32 [#allocation10], 4
      %s303 = int_to_ptr.vmem [resolvable:$true] %s302
      %305 = dma.vmem_to_hbm [thread:$0]  %s303, 64, %s4, [#allocation4]
    $region37: #{tpu_custom_call.1} parent=1 // pred_fallthru
      _
    // Predicated region
    $region38: #{tpu_custom_call.1} parent=1 // pred_check
      _
    $region39: #{tpu_custom_call.1} parent=1 // pred_check_branch
      %307 = sbr.rel (0) target = $region41
    $region40: #{tpu_custom_call.1} parent=1 // pred_region
      %308 = dma.done [#allocation4], 64
    $region41: #{tpu_custom_call.1} parent=1 // pred_fallthru
      _
    %309 = vsyncpa [#allocation3], 1
    %310 = vsyncpa [#allocation6], 1
    %311 = vsyncpa [#allocation9], 1
    %312 = vsyncpa [#allocation4], 1

</llo_original>
